<compile_context>
chip_gen: v5e
topology: v5e:2x2
jax: 0.10.0
libtpu: 0.0.40
codegen_flags: <defaults>
</compile_context>

<pallas_src>
import functools

import jax
import jax.numpy as jnp
from jax.experimental import pallas as pl
from jax.experimental.pallas import tpu as pltpu

BN_EPS = 1e-5          # nn.BatchNorm1d default eps
NORM_EPS = 1e-12       # F.normalize default eps
TEMP = 1.1             # literal 1.1 used twice in ObjectNeck.forward ('group')

_PAR1 = pltpu.CompilerParams(dimension_semantics=("parallel",))
_ARB1 = pltpu.CompilerParams(dimension_semantics=("arbitrary",))


# ----------------------------------------------------------------------------
# K1: backbone stand-in (1x1 conv + ReLU), tiled over N = B*HW
# ----------------------------------------------------------------------------
def _backbone_kernel(im_ref, w_ref, x_ref):
    x = jnp.dot(w_ref[...], im_ref[...], preferred_element_type=jnp.float32)
    x_ref[...] = jnp.maximum(x, 0.0).astype(x_ref.dtype)


def backbone_conv(im_cf, w_bb, *, tile_n=256):
    Cin, N = im_cf.shape
    C = w_bb.shape[0]
    if N < tile_n or N % tile_n != 0:
        tile_n = N
    nt = N // tile_n
    return pl.pallas_call(
        _backbone_kernel,
        out_shape=jax.ShapeDtypeStruct((C, N), jnp.bfloat16),
        grid=(nt,),
        in_specs=[pl.BlockSpec((Cin, tile_n), lambda t: (0, t)),
                  pl.BlockSpec((C, Cin), lambda t: (0, 0))],
        out_specs=pl.BlockSpec((C, tile_n), lambda t: (0, t)),
        compiler_params=_PAR1,
    )(im_cf.astype(jnp.bfloat16), w_bb.astype(jnp.bfloat16))


# ----------------------------------------------------------------------------
# K2: adaptive-avg-pool (mean over HW, per batch) + proj MLP (z_g branch)
# ----------------------------------------------------------------------------
def _pool_proj_kernel(x_ref, w1_ref, g1_ref, b1_ref, w2_ref, zg_ref):
    xf = x_ref[...].astype(jnp.float32)                       # (C, B, HW)
    pooled = jnp.mean(xf, axis=-1)                            # (C, B)  lane reduce
    h = jnp.dot(w1_ref[...], pooled, preferred_element_type=jnp.float32)  # (HID, B)
    mu = jnp.mean(h, axis=1, keepdims=True)
    var = jnp.mean((h - mu) ** 2, axis=1, keepdims=True)
    hn = (h - mu) * jax.lax.rsqrt(var + BN_EPS)
    hn = jnp.maximum(hn * g1_ref[...] + b1_ref[...], 0.0)
    zg = jnp.dot(w2_ref[...], hn, preferred_element_type=jnp.float32)
    zg_ref[...] = zg.astype(zg_ref.dtype)


def pool_proj(x3, p):
    C, B, HW = x3.shape
    HID = p['w1'].shape[0]
    OUT = p['w2'].shape[0]
    g1 = p['g1'].reshape(HID, 1).astype(jnp.float32)
    b1 = p['b1'].reshape(HID, 1).astype(jnp.float32)
    return pl.pallas_call(
        _pool_proj_kernel,
        out_shape=jax.ShapeDtypeStruct((OUT, B), jnp.float32),
        grid=(1,),
        in_specs=[pl.BlockSpec((C, B, HW), lambda i: (0, 0, 0)),
                  pl.BlockSpec((HID, C), lambda i: (0, 0)),
                  pl.BlockSpec((HID, 1), lambda i: (0, 0)),
                  pl.BlockSpec((HID, 1), lambda i: (0, 0)),
                  pl.BlockSpec((OUT, HID), lambda i: (0, 0))],
        out_specs=pl.BlockSpec((OUT, B), lambda i: (0, 0)),
        compiler_params=_ARB1,
    )(x3, p['w1'].astype(jnp.float32), g1, b1, p['w2'].astype(jnp.float32))


# ----------------------------------------------------------------------------
# K3 + K4: MLP1D (fc -> BN1d(train) -> ReLU -> fc), tiled over N, two-pass BN
# ----------------------------------------------------------------------------
def _mlp_matmul_stats_kernel(x_ref, w1_ref, h_ref, sum_ref, ssq_ref):
    t = pl.program_id(0)
    h = jnp.dot(w1_ref[...], x_ref[...], preferred_element_type=jnp.float32)
    h_ref[...] = h.astype(h_ref.dtype)

    @pl.when(t == 0)
    def _():
        sum_ref[...] = jnp.zeros_like(sum_ref)
        ssq_ref[...] = jnp.zeros_like(ssq_ref)

    sum_ref[...] += jnp.sum(h, axis=1, keepdims=True)
    ssq_ref[...] += jnp.sum(h * h, axis=1, keepdims=True)


def _mlp_norm_matmul_kernel(h_ref, sum_ref, ssq_ref, g_ref, b_ref, w2_ref,
                            o_ref, *, inv_n):
    mu = sum_ref[...] * inv_n
    var = ssq_ref[...] * inv_n - mu * mu
    inv = jax.lax.rsqrt(var + BN_EPS)
    scale = g_ref[...] * inv
    shift = b_ref[...] - mu * scale
    h = h_ref[...].astype(jnp.float32)
    hn = jnp.maximum(h * scale + shift, 0.0)
    o_ref[...] = jnp.dot(w2_ref[...], hn.astype(jnp.bfloat16),
                         preferred_element_type=jnp.float32).astype(o_ref.dtype)


def mlp1d(x, p, *, out_dtype, tile_n=256):
    Cin, N = x.shape
    HID = p['w1'].shape[0]
    OUT = p['w2'].shape[0]
    if N < tile_n or N % tile_n != 0:
        tile_n = N
    nt = N // tile_n
    g1 = p['g1'].reshape(HID, 1).astype(jnp.float32)
    b1 = p['b1'].reshape(HID, 1).astype(jnp.float32)
    w1 = p['w1'].astype(jnp.bfloat16)
    w2 = p['w2'].astype(jnp.bfloat16)
    xb = x.astype(jnp.bfloat16)

    # pass 1: hidden activation (bf16 to HBM) + per-channel BN stats accumulators
    h, hsum, hssq = pl.pallas_call(
        _mlp_matmul_stats_kernel,
        out_shape=(jax.ShapeDtypeStruct((HID, N), jnp.bfloat16),
                   jax.ShapeDtypeStruct((HID, 1), jnp.float32),
                   jax.ShapeDtypeStruct((HID, 1), jnp.float32)),
        grid=(nt,),
        in_specs=[pl.BlockSpec((Cin, tile_n), lambda t: (0, t)),
                  pl.BlockSpec((HID, Cin), lambda t: (0, 0))],
        out_specs=[pl.BlockSpec((HID, tile_n), lambda t: (0, t)),
                   pl.BlockSpec((HID, 1), lambda t: (0, 0)),
                   pl.BlockSpec((HID, 1), lambda t: (0, 0))],
        compiler_params=_ARB1,
    )(xb, w1)

    # pass 2: normalize + ReLU + second fc (independent tiles -> "parallel")
    return pl.pallas_call(
        functools.partial(_mlp_norm_matmul_kernel, inv_n=1.0 / float(N)),
        out_shape=jax.ShapeDtypeStruct((OUT, N), out_dtype),
        grid=(nt,),
        in_specs=[pl.BlockSpec((HID, tile_n), lambda t: (0, t)),
                  pl.BlockSpec((HID, 1), lambda t: (0, 0)),
                  pl.BlockSpec((HID, 1), lambda t: (0, 0)),
                  pl.BlockSpec((HID, 1), lambda t: (0, 0)),
                  pl.BlockSpec((HID, 1), lambda t: (0, 0)),
                  pl.BlockSpec((OUT, HID), lambda t: (0, 0))],
        out_specs=pl.BlockSpec((OUT, tile_n), lambda t: (0, t)),
        compiler_params=_PAR1,
    )(h, hsum, hssq, g1, b1, w2)


# ----------------------------------------------------------------------------
# K5: 'group' attention — grid over batch, per-batch blocks, resident output
# ----------------------------------------------------------------------------
def _group_attn_kernel(z_ref, x_ref, o_ref, *, num_heads, dh):
    b = pl.program_id(0)
    z = z_ref[...].astype(jnp.float32)                        # (D, HW)
    x = x_ref[...]                                            # (C, HW) bf16
    D, HW = z.shape
    C = x.shape[0]
    ch = C // num_heads

    # F.normalize(z_feat, dim=1) / 1.1, then / 1.1 again, softmax over HW.
    ssq = jnp.sum(z * z, axis=0, keepdims=True)               # (1, HW)
    a = z * jax.lax.rsqrt(jnp.maximum(ssq, NORM_EPS * NORM_EPS))
    a = a * (1.0 / (TEMP * TEMP))
    m = jnp.max(a, axis=-1, keepdims=True)
    p = jnp.exp(a - m)
    s = jnp.sum(p, axis=-1, keepdims=True)
    attn = p * pl.reciprocal(s, approx=True)                  # EUP reciprocal

    # per-head contraction over HW: (H, C/H, HW) x (H, D/H, HW) -> (H, C/H, D/H)
    val = jnp.einsum('hck,hdk->hcd',
                     x.astype(jnp.bfloat16).reshape(num_heads, ch, HW),
                     attn.astype(jnp.bfloat16).reshape(num_heads, dh, HW),
                     preferred_element_type=jnp.float32)
    # Direct store of this batch's (C, dh) slab into the VMEM-resident output;
    # the full lane-dense (C, B*dh) block is written back to HBM once at the end.
    col = pl.multiple_of(b * dh, dh)
    o_ref[:, pl.ds(col, dh)] = val.reshape(C, dh).astype(o_ref.dtype)


def group_attention(z_feat, x, *, num_heads, batch, hw):
    D, N = z_feat.shape
    C = x.shape[0]
    dh = D // num_heads
    kern = functools.partial(_group_attn_kernel, num_heads=num_heads, dh=dh)
    return pl.pallas_call(
        kern,
        out_shape=jax.ShapeDtypeStruct((C, batch * dh), jnp.bfloat16),
        grid=(batch,),
        in_specs=[pl.BlockSpec((D, hw), lambda b: (0, b)),
                  pl.BlockSpec((C, hw), lambda b: (0, b))],
        out_specs=pl.BlockSpec((C, batch * dh), lambda b: (0, 0)),
        compiler_params=_ARB1,
    )(z_feat, x)


# ----------------------------------------------------------------------------
# EncoderObj forward (mask_type='group')
# ----------------------------------------------------------------------------
def encoder_obj_forward(im, params, num_heads=8):
    B, Cimg, Hs, Ws = im.shape
    HW = Hs * Ws
    N = B * HW

    # (B, Cimg, H, W) -> channels-major (Cimg, B*HW); zero-pad image channels to a
    # multiple of 8 for a clean MXU contraction (zero rows do not change the conv).
    im_cf = jnp.transpose(im.reshape(B, Cimg, HW), (1, 0, 2)).reshape(Cimg, N)
    w_bb = params['backbone_w']
    pad = (-Cimg) % 8
    if pad:
        im_cf = jnp.pad(im_cf, ((0, pad), (0, 0)))
        w_bb = jnp.pad(w_bb, ((0, 0), (0, pad)))

    # backbone stand-in, tiled over N
    x = backbone_conv(im_cf, w_bb)                              # (C, N) bf16
    C = x.shape[0]

    # z_g branch: fused adaptive-avg-pool + proj MLP (HBM reshape is metadata-only)
    z_g_cn = pool_proj(x.reshape(C, B, HW), params['proj'])     # (OUT, B) f32

    # proj_pixel: tiled MLP1D with two-pass BN
    z_feat = mlp1d(x, params['proj_pixel'], out_dtype=jnp.bfloat16)   # (OUT, N)

    # 'group' attention -> channels-major (C, B*dh) slab, fed straight to proj_obj
    obj = group_attention(z_feat, x, num_heads=num_heads, batch=B, hw=HW)

    # proj_obj
    obj_val_cn = mlp1d(obj, params['proj_obj'], out_dtype=jnp.float32)  # (OUT, B*dh)

    # back to PyTorch (B, C, L) layouts (tiny tensors)
    OUT = z_g_cn.shape[0]
    dh = z_feat.shape[0] // num_heads
    z_g = jnp.transpose(z_g_cn, (1, 0))[:, :, None]                     # (B, OUT, 1)
    obj_val = jnp.transpose(obj_val_cn.reshape(OUT, B, dh), (1, 0, 2))  # (B, OUT, dh)

    out = {}   # 'group' branch populates nothing
    return z_g, obj_val, out


# ----------------------------------------------------------------------------
# Deterministic parameter init + smoke test
# ----------------------------------------------------------------------------
def _kaiming(key, shape):
    fan_in = shape[1]
    return jax.random.normal(key, shape, jnp.float32) * jnp.sqrt(2.0 / fan_in)


def _mlp_params(k1, k2, in_c, hid_c, out_c):
    return dict(
        w1=_kaiming(k1, (hid_c, in_c)),
        g1=jnp.ones((hid_c,), jnp.float32),
        b1=jnp.zeros((hid_c,), jnp.float32),
        w2=_kaiming(k2, (out_c, hid_c)),
    )


if __name__ == "__main__":
    B, CIMG, HS, WS = 2, 3, 16, 16          # input image (NCHW), HW = 256
    C = 64                                  # backbone out_channels (in_dim)
    HID, OUT = 64, 64                       # hid_dim, out_dim
    NUM_HEADS = 8                           # C/H = OUT/H = 8 -> sublane-aligned heads

    key = jax.random.PRNGKey(0)
    ks = jax.random.split(key, 8)

    params = {
        'backbone_w': _kaiming(ks[0], (C, CIMG)),
        'proj':       _mlp_params(ks[1], ks[2], C, HID, OUT),
        'proj_pixel': _mlp_params(ks[3], ks[4], C, HID, OUT),
        'proj_obj':   _mlp_params(ks[5], ks[6], C, HID, OUT),
    }

    im = jax.random.normal(ks[7], (B, CIMG, HS, WS), jnp.float32)

    z_g, obj_val, out = encoder_obj_forward(im, params, num_heads=NUM_HEADS)
    jax.block_until_ready((z_g, obj_val))

    assert z_g.shape == (B, OUT, 1)
    assert obj_val.shape == (B, OUT, OUT // NUM_HEADS)
    assert bool(jnp.all(jnp.isfinite(z_g))) and bool(jnp.all(jnp.isfinite(obj_val)))
    print("KERNEL_OK")
</pallas_src>

<mosaic_0001>
module attributes {stable_mosaic.version = 11 : i64} {
  func.func @_backbone_kernel(%arg0: i32, %arg1: memref<8x256xbf16, #tpu.memory_space<vmem>>, %arg2: memref<64x8xbf16, #tpu.memory_space<vmem>>, %arg3: memref<64x256xbf16, #tpu.memory_space<vmem>>) attributes {dimension_semantics = [#tpu.dimension_semantics<parallel>], iteration_bounds = array<i64: 2>, scalar_prefetch = 0 : i64, scratch_operands = 0 : i64, tpu.core_type = #tpu.core_type<tc>, window_params = [{transform_indices = @transform_0, window_bounds = array<i64: 8, 256>}, {pipeline_mode = #tpu.pipeline_mode<synchronous>, transform_indices = @transform_1, window_bounds = array<i64: 64, 8>}, {transform_indices = @transform_2, window_bounds = array<i64: 64, 256>}]} {
    %c0 = arith.constant 0 : index
    %c0_0 = arith.constant 0 : index
    %0 = vector.load %arg2[%c0, %c0_0] : memref<64x8xbf16, #tpu.memory_space<vmem>>, vector<64x8xbf16>
    %c0_1 = arith.constant 0 : index
    %c0_2 = arith.constant 0 : index
    %1 = vector.load %arg1[%c0_1, %c0_2] : memref<8x256xbf16, #tpu.memory_space<vmem>>, vector<8x256xbf16>
    %cst = arith.constant dense<0.000000e+00> : vector<64x256xf32>
    %2 = tpu.matmul %0, %1, %cst {dimension_numbers = #tpu.dot_dimension_numbers<[1], [0], [0], [1], [0, 0, 1, 1], [], []>} : vector<64x8xbf16>, vector<8x256xbf16>, vector<64x256xf32> -> vector<64x256xf32>
    %cst_3 = arith.constant 0.000000e+00 : f32
    %3 = vector.broadcast %cst_3 : f32 to vector<64x256xf32>
    %4 = arith.maximumf %2, %3 : vector<64x256xf32>
    %5 = arith.truncf %4 : vector<64x256xf32> to vector<64x256xbf16>
    %c0_4 = arith.constant 0 : index
    %c0_5 = arith.constant 0 : index
    %6 = vector.load %arg3[%c0_4, %c0_5] : memref<64x256xbf16, #tpu.memory_space<vmem>>, vector<64x256xbf16>
    tpu.vector_store %arg3[%c0_4, %c0_5], %5 {strides = array<i32>} : memref<64x256xbf16, #tpu.memory_space<vmem>>, vector<64x256xbf16>,
    return
  }
  func.func @transform_0(%arg0: i32) -> (i32, i32) {
    %c0_i32 = arith.constant 0 : i32
    %c0_i32_0 = arith.constant 0 : i32
    return %c0_i32, %arg0 : i32, i32
  }
  func.func @transform_1(%arg0: i32) -> (i32, i32) {
    %c0_i32 = arith.constant 0 : i32
    %c0_i32_0 = arith.constant 0 : i32
    %c0_i32_1 = arith.constant 0 : i32
    return %c0_i32, %c0_i32_0 : i32, i32
  }
  func.func @transform_2(%arg0: i32) -> (i32, i32) {
    %c0_i32 = arith.constant 0 : i32
    %c0_i32_0 = arith.constant 0 : i32
    return %c0_i32, %arg0 : i32, i32
  }
}

</mosaic_0001>

<llo_original>
// kernel: tpu_custom_call.1
$region0: #{tpu_custom_call.1}
  #allocation0 [shape = 'u32[]', space=smem, size = 0x4, offset = 0x4, fixed_abs, tag = 'smem constant byte address 0x4 - core index']
  #allocation1 [shape = 'u32[72,128]{1,0:T(1,128)}', space=vmem, size = 0x9000, scoped, tag = 'internal scratch']
  %s0 = inlined_call_operand.vmem [shape: bf16[8,512], index: 0, kind: input, shape index: {}]
  %s1 = inlined_call_operand.vmem [shape: bf16[64,8], index: 1, kind: input, shape index: {}]
  %s2 = inlined_call_operand.hbm [shape: bf16[64,512], index: 2, kind: output, shape index: {}]
  %s3 = sld [smem:[#allocation0]]
  $region41: #{tpu_custom_call.1} parent=0
    _
  %s5 = ssub.s32 1, %s3
  %s6 = scalar_select 0, %s5, %s3
  $region1: #{tpu_custom_call.1} parent=0
    #allocation2 [shape = 'u8[65536]{0}', space=vmem, size = 0x10000, scoped, tag = 'output window, operand 0']
    #allocation3 [shape = 's32[2]{0}', space=sflag, size = 0x8, scoped, tag = 'scoped memory for tpu_custom_call.1']
    %7 = vsyncpa [#allocation3], 0
    %s8 = scalar_lea.sflag [#allocation3], 1
    %9 = vsyncpa %s8, 0
    loop: start=0, step=1, limit=4
    $region2: #{tpu_custom_call.1} parent=1 // loop_pre_header
      _
    $region3: #{tpu_custom_call.1} parent=1 // loop_header
      %s11 = sphi 0, %s15
      %p12 = scmp.ge.s32.totalorder %s11, 4
      %s21 = sphi 0, %s23
      %s24 = sphi 0, %s21
      %s25 = sphi 0, %s24
      %s41 = sphi 0, %s25
      %s45 = sphi 0, %s45
      %s47 = sphi 0, %s45
      %s48 = sphi 0, %s47
      %s62 = sphi 0, %s48
      %s68 = sphi 0, %s70
      %s71 = sphi 0, %s68
      %s72 = sphi 0, %s71
      %s88 = sphi 0, %s72
    $region4: #{tpu_custom_call.1} parent=1 // loop_header_branch
      %14 = sbr.rel (%p12) target = $region8
    $region5: #{tpu_custom_call.1} parent=1 // loop_body
      %s16 = ssub.s32 %s11, 1
      %s17 = ssub.s32 %s11, 2
      %s18 = sadd.s32 %s11, 1
      %s19 = ssub.s32 %s11, %s18
      %p20 = scmp.eq.s32.totalorder %s19, 0
      %s22 = sadd.s32 %s21, 1
      %s23 = scalar_select %p20, %s21, %s22
      %p26 = pneg %p20
      %p27 = scmp.eq.s32.totalorder %s11, 1
      %p28 = por %p26, %p27
      %p29 = scmp.ne.s32.totalorder %s21, %s24
      %p30 = scmp.eq.s32.totalorder %s11, 0
      %p31 = por %p29, %p30
      %p32 = scmp.ne.s32.totalorder %s21, %s24
      %p33 = scmp.eq.s32.totalorder %s16, 1
      %p34 = por %p32, %p33
      %p35 = scmp.ne.s32.totalorder %s24, %s25
      %p36 = scmp.eq.s32.totalorder %s16, 0
      %p37 = por %p35, %p36
      %p38 = scmp.ne.s32.totalorder %s24, %s25
      %p39 = scmp.eq.s32.totalorder %s17, 1
      %p40 = por %p38, %p39
      %p42 = scmp.ne.s32.totalorder %s25, %s41
      %p43 = scmp.eq.s32.totalorder %s17, 0
      %p44 = por %p42, %p43
      %s46 = sadd.s32 %s45, 1
      %p49 = scmp.eq.s32.totalorder %s11, 1
      %p50 = scmp.ne.s32.totalorder %s45, %s47
      %p51 = scmp.eq.s32.totalorder %s11, 0
      %p52 = por %p50, %p51
      %p53 = scmp.ne.s32.totalorder %s45, %s47
      %p54 = scmp.eq.s32.totalorder %s16, 1
      %p55 = por %p53, %p54
      %p56 = scmp.ne.s32.totalorder %s47, %s48
      %p57 = scmp.eq.s32.totalorder %s16, 0
      %p58 = por %p56, %p57
      %p59 = scmp.ne.s32.totalorder %s47, %s48
      %p60 = scmp.eq.s32.totalorder %s17, 1
      %p61 = por %p59, %p60
      %p63 = scmp.ne.s32.totalorder %s48, %s62
      %p64 = scmp.eq.s32.totalorder %s17, 0
      %p65 = por %p63, %p64
      %s66 = ssub.s32 %s11, %s18
      %p67 = scmp.eq.s32.totalorder %s66, 0
      %s69 = sadd.s32 %s68, 1
      %s70 = scalar_select %p67, %s68, %s69
      %p73 = pneg %p67
      %p74 = scmp.eq.s32.totalorder %s11, 1
      %p75 = por %p73, %p74
      %p76 = scmp.ne.s32.totalorder %s68, %s71
      %p77 = scmp.eq.s32.totalorder %s11, 0
      %p78 = por %p76, %p77
      %p79 = scmp.ne.s32.totalorder %s68, %s71
      %p80 = scmp.eq.s32.totalorder %s16, 1
      %p81 = por %p79, %p80
      %p82 = scmp.ne.s32.totalorder %s71, %s72
      %p83 = scmp.eq.s32.totalorder %s16, 0
      %p84 = por %p82, %p83
      %p85 = scmp.ne.s32.totalorder %s71, %s72
      %p86 = scmp.eq.s32.totalorder %s17, 1
      %p87 = por %p85, %p86
      %p89 = scmp.ne.s32.totalorder %s72, %s88
      %p90 = scmp.eq.s32.totalorder %s17, 0
      %p91 = por %p89, %p90
      %p92 = scmp.le.s32.totalorder 1, %s11
      %p93 = scmp.lt.s32.totalorder %s11, 3
      %p94 = pnand %p92, %p93
      %p95 = pneg %p94
      // Predicated region
      $region9: #{tpu_custom_call.1} parent=5 // pred_check
        _
      $region10: #{tpu_custom_call.1} parent=5 // pred_check_branch
        %97 = sbr.rel (%p94) target = $region12
      $region11: #{tpu_custom_call.1} parent=5 // pred_region
        %s98 = ssub.s32 %s11, 1
        // Predicated region
        $region13: #{tpu_custom_call.1} parent=11 // pred_check
          %p99 = pneg %p58
        $region14: #{tpu_custom_call.1} parent=11 // pred_check_branch
          %101 = sbr.rel (%p99) target = $region16
        $region15: #{tpu_custom_call.1} parent=11 // pred_region
          _
        $region16: #{tpu_custom_call.1} parent=11 // pred_fallthru
          _
      $region12: #{tpu_custom_call.1} parent=5 // pred_fallthru
        _
      %p102 = scmp.lt.s32.totalorder %s11, 2
      // Predicated region
      $region17: #{tpu_custom_call.1} parent=5 // pred_check
        %p103 = pneg %p102
      $region18: #{tpu_custom_call.1} parent=5 // pred_check_branch
        %105 = sbr.rel (%p103) target = $region20
      $region19: #{tpu_custom_call.1} parent=5 // pred_region
        // Predicated region
        $region21: #{tpu_custom_call.1} parent=19 // pred_check
          %p106 = pneg %p31
        $region22: #{tpu_custom_call.1} parent=19 // pred_check_branch
          %108 = sbr.rel (%p106) target = $region24
        $region23: #{tpu_custom_call.1} parent=19 // pred_region
          %s109 = smul.u32 2, %s11
          %p110 = scmp.lt.s32.totalorder %s109, 3
          %s111 = scalar_select %p110, %s109, 3
          %s112 = smul.addr %s111, 4
          %s113 = scalar_lea.vmem %s0, %s112
          %s114 = smul.u32 2, %s11
        $region24: #{tpu_custom_call.1} parent=19 // pred_fallthru
          _
      $region20: #{tpu_custom_call.1} parent=5 // pred_fallthru
        _
      %p115 = scmp.le.s32.totalorder 1, %s11
      %p116 = scmp.lt.s32.totalorder %s11, 3
      %p117 = pnand %p115, %p116
      %p118 = pneg %p117
      // Predicated region
      $region25: #{tpu_custom_call.1} parent=5 // pred_check
        _
      $region26: #{tpu_custom_call.1} parent=5 // pred_check_branch
        %120 = sbr.rel (%p117) target = $region28
      $region27: #{tpu_custom_call.1} parent=5 // pred_region
        %s121 = ssub.s32 %s11, 1
        %s122 = smul.u32 2, %s16
        %p123 = scmp.lt.s32.totalorder %s122, 3
        %s124 = scalar_select %p123, %s122, 3
        %s125 = smul.addr %s124, 4
        %s126 = scalar_lea.vmem %s0, %s125
        %p127 = pneg %p37
        %p128 = pneg %p34
        %p129 = pneg %p58
        %p130 = pneg %p55
        %p131 = pneg %p84
        %p132 = pneg %p81
        %s133 = sand.u32 %s71, 1
        %s134 = scalar_lea.sflag [#allocation3], %s133
        %s135 = sand.u32 %s71, 1
        %s136 = smul.addr %s135, 64
        %s137 = scalar_lea.vmem [#allocation2], %s136
        %s138 = smul.u32 2, %s16
        %p139 = scmp.lt.s32.totalorder %s138, 3
        %s140 = scalar_select %p139, %s138, 3
        %s141 = smul.addr %s140, 4
        %s142 = scalar_lea.vmem %s0, %s141
        %s143 = smul.u32 2, %s16
        %s144 = smul.u32 2, %s16
        %v146 = vld [vmem:[%s1] sm:$0xf]
        %v147 = vld [vmem:[%s1 + $0x4] sm:$0xf]
        %v148 = vld [vmem:[%s1 + $0x8] sm:$0xf]
        %v149 = vld [vmem:[%s1 + $0xc] sm:$0xf]
        %v150 = vld [vmem:[%s1 + $0x10] sm:$0xf]
        %v151 = vld [vmem:[%s1 + $0x14] sm:$0xf]
        %v152 = vld [vmem:[%s1 + $0x18] sm:$0xf]
        %v153 = vld [vmem:[%s1 + $0x1c] sm:$0xf]
        %v154 = vld [vmem:[%s142] sm:$0xff]
        %v163 = vunpack.c.l.b16 %v146
        %v164 = vunpack.c.l.b16 %v147
        %v165 = vunpack.c.l.b16 %v148
        %v166 = vunpack.c.l.b16 %v149
        %v167 = vunpack.c.l.b16 %v150
        %v168 = vunpack.c.l.b16 %v151
        %v169 = vunpack.c.l.b16 %v152
        %v170 = vunpack.c.l.b16 %v153
        %v171 = vpack.c.b16 %v164, %v163
        %v172 = vpack.c.b16 %v166, %v165
        %v173 = vpack.c.b16 %v168, %v167
        %v174 = vpack.c.b16 %v170, %v169
        %v176 = vunpack.c.l.b16 %v154
        %v177 = vunpack.c.h.b16 %v154
        %v178 = vpack.c.b16 %v176, %v176
        %v179 = vpack.c.b16 %v177, %v177
        %vm180 = vcmask 64512
        %v182 = vsel %vm180, %v171, 0
        %v185 = vsel %vm180, %v172, 0
        %v188 = vsel %vm180, %v173, 0
        %v191 = vsel %vm180, %v174, 0
        %vm193 = vcmask 1043456
        %v195 = vsel %vm193, %v178, 0
        %v198 = vsel %vm193, %v179, 0
        %200 = vmatpush.bf16.msra.mxu0 0
        %201 = vmatpush.bf16.msra.mxu0 0
        %202 = vmatpush.bf16.msra.mxu0 0
        %203 = vmatpush.bf16.msra.mxu0 0
        %204 = vmatpush.bf16.msra.mxu0 0
        %205 = vmatpush.bf16.msra.mxu0 0
        %206 = vmatpush.bf16.msra.mxu0 0
        %207 = vmatpush.bf16.msra.mxu0 %v195
        %208 = vmatmul.bf16.gmra.mxu0 %v182
        %v209 = vpop.f32.mrf.mxu0
        %v210 = vadd.f32 0.0, %v209
        %v211 = vpop.f32.mrf.mxu0
        %v212 = vadd.f32 0.0, %v211
        %213 = vmatmul.bf16.gmra.mxu0 %v185
        %v214 = vpop.f32.mrf.mxu0
        %v215 = vadd.f32 0.0, %v214
        %v216 = vpop.f32.mrf.mxu0
        %v217 = vadd.f32 0.0, %v216
        %218 = vmatmul.bf16.gmra.mxu0 %v188
        %v219 = vpop.f32.mrf.mxu0
        %v220 = vadd.f32 0.0, %v219
        %v221 = vpop.f32.mrf.mxu0
        %v222 = vadd.f32 0.0, %v221
        %223 = vmatmul.bf16.gmra.mxu0 %v191
        %v224 = vpop.f32.mrf.mxu0
        %v225 = vadd.f32 0.0, %v224
        %v226 = vpop.f32.mrf.mxu0
        %v227 = vadd.f32 0.0, %v226
        %228 = vdwg.mxu0
        %229 = vmatpush.bf16.msra.mxu0 0
        %230 = vmatpush.bf16.msra.mxu0 0
        %231 = vmatpush.bf16.msra.mxu0 0
        %232 = vmatpush.bf16.msra.mxu0 0
        %233 = vmatpush.bf16.msra.mxu0 0
        %234 = vmatpush.bf16.msra.mxu0 0
        %235 = vmatpush.bf16.msra.mxu0 0
        %236 = vmatpush.bf16.msra.mxu0 %v198
        %237 = vmatmul.bf16.gmra.mxu0 %v182
        %v238 = vpop.f32.mrf.mxu0
        %v239 = vadd.f32 0.0, %v238
        %v240 = vpop.f32.mrf.mxu0
        %v241 = vadd.f32 0.0, %v240
        %242 = vmatmul.bf16.gmra.mxu0 %v185
        %v243 = vpop.f32.mrf.mxu0
        %v244 = vadd.f32 0.0, %v243
        %v245 = vpop.f32.mrf.mxu0
        %v246 = vadd.f32 0.0, %v245
        %247 = vmatmul.bf16.gmra.mxu0 %v188
        %v248 = vpop.f32.mrf.mxu0
        %v249 = vadd.f32 0.0, %v248
        %v250 = vpop.f32.mrf.mxu0
        %v251 = vadd.f32 0.0, %v250
        %252 = vmatmul.bf16.gmra.mxu0 %v191
        %v253 = vpop.f32.mrf.mxu0
        %v254 = vadd.f32 0.0, %v253
        %v255 = vpop.f32.mrf.mxu0
        %v256 = vadd.f32 0.0, %v255
        %257 = vdwg.mxu0
        %v258 = vmax.f32 %v210, 0.0
        %v259 = vmax.f32 %v239, 0.0
        %v260 = vmax.f32 %v212, 0.0
        %v261 = vmax.f32 %v241, 0.0
        %v262 = vmax.f32 %v215, 0.0
        %v263 = vmax.f32 %v244, 0.0
        %v264 = vmax.f32 %v217, 0.0
        %v265 = vmax.f32 %v246, 0.0
        %v266 = vmax.f32 %v220, 0.0
        %v267 = vmax.f32 %v249, 0.0
        %v268 = vmax.f32 %v222, 0.0
        %v269 = vmax.f32 %v251, 0.0
        %v270 = vmax.f32 %v225, 0.0
        %v271 = vmax.f32 %v254, 0.0
        %v272 = vmax.f32 %v227, 0.0
        %v273 = vmax.f32 %v256, 0.0
        %v274 = vpack.c.bf16 %v259, %v258
        %v275 = vpack.c.bf16 %v261, %v260
        %v276 = vpack.c.bf16 %v263, %v262
        %v277 = vpack.c.bf16 %v265, %v264
        %v278 = vpack.c.bf16 %v267, %v266
        %v279 = vpack.c.bf16 %v269, %v268
        %v280 = vpack.c.bf16 %v271, %v270
        %v281 = vpack.c.bf16 %v273, %v272
        %282 = vst [vmem:[%s137] sm:$0xff] %v274
        %283 = vst [vmem:[%s137 + $0x8] sm:$0xff] %v275
        %284 = vst [vmem:[%s137 + $0x10] sm:$0xff] %v276
        %285 = vst [vmem:[%s137 + $0x18] sm:$0xff] %v277
        %286 = vst [vmem:[%s137 + $0x20] sm:$0xff] %v278
        %287 = vst [vmem:[%s137 + $0x28] sm:$0xff] %v279
        %288 = vst [vmem:[%s137 + $0x30] sm:$0xff] %v280
        %289 = vst [vmem:[%s137 + $0x38] sm:$0xff] %v281
        %s290 = sand.u32 %s71, 1
        %s291 = scalar_lea.sflag [#allocation3], %s290
        %s292 = sand.u32 %s71, 1
        %s293 = smul.addr %s292, 64
        %s294 = scalar_lea.vmem [#allocation2], %s293
        // Predicated region
        $region29: #{tpu_custom_call.1} parent=27 // pred_check
          %p295 = pneg %p81
        $region30: #{tpu_custom_call.1} parent=27 // pred_check_branch
          %297 = sbr.rel (%p295) target = $region32
        $region31: #{tpu_custom_call.1} parent=27 // pred_region
          %s298 = smul.u32 2, %s16
          %300 = vsyncadd %s291, 0
          %s301 = smul.addr %s298, 4
          %s302 = scalar_lea.hbm %s2, %s301
          %s303 = sshll.u32 %s294, 4
          %s304 = int_to_ptr.vmem [resolvable:$true] %s303
          %s305 = sshll.u32 %s302, 4
          %s306 = int_to_ptr.hbm [resolvable:$true] %s305
          %311 = dma.vmem_to_hbm [thread:$0]  %s304, 1024, %s306, %s291, 128, 256, 8
        $region32: #{tpu_custom_call.1} parent=27 // pred_fallthru
          _
      $region28: #{tpu_custom_call.1} parent=5 // pred_fallthru
        _
      %p312 = scmp.le.s32.totalorder 2, %s11
      // Predicated region
      $region33: #{tpu_custom_call.1} parent=5 // pred_check
        %p313 = pneg %p312
      $region34: #{tpu_custom_call.1} parent=5 // pred_check_branch
        %315 = sbr.rel (%p313) target = $region36
      $region35: #{tpu_custom_call.1} parent=5 // pred_region
        %s316 = ssub.s32 %s11, 2
        // Predicated region
        $region37: #{tpu_custom_call.1} parent=35 // pred_check
          %p317 = pneg %p87
        $region38: #{tpu_custom_call.1} parent=35 // pred_check_branch
          %319 = sbr.rel (%p317) target = $region40
        $region39: #{tpu_custom_call.1} parent=35 // pred_region
          %s320 = sand.u32 %s72, 1
          %s321 = scalar_lea.sflag [#allocation3], %s320
          %s322 = sand.u32 %s72, 1
          %s323 = smul.addr %s322, 64
          %s324 = scalar_lea.vmem [#allocation2], %s323
          %326 = dma.done %s321, 1024
        $region40: #{tpu_custom_call.1} parent=35 // pred_fallthru
          _
      $region36: #{tpu_custom_call.1} parent=5 // pred_fallthru
        _
    $region6: #{tpu_custom_call.1} parent=1 // loop_footer
      %s15 = sadd.s32 1, %s11
    $region7: #{tpu_custom_call.1} parent=1 // loop_footer_branch
      %10 = sbr.rel target = $region3
    $region8: #{tpu_custom_call.1} parent=1 // loop_exit
      _
    %327 = vsyncpa [#allocation3], 1
    %s328 = scalar_lea.sflag [#allocation3], 1
    %329 = vsyncpa %s328, 1

</llo_original>
